<compile_context>
chip_gen: v5e
topology: v5e:2x2
jax: 0.10.0
libtpu: 0.0.40
codegen_flags: <defaults>
</compile_context>

<pallas_src>
import functools
import math

import jax
import jax.numpy as jnp
from jax.experimental import pallas as pl
from jax.experimental.pallas import tpu as pltpu

_INV_SQRT2 = 0.7071067811865476


def _round_up(n, m):
    return ((n + m - 1) // m) * m


def _tcn_kernel(*refs, K, dilation, pad, tt, c_in_p, c_out_p, halo_w,
                has_ds, has_halo, has_taps):
    it = iter(refs)
    x_ref = next(it)
    h_ref = next(it) if has_halo else None
    wt_ref = next(it) if has_taps else None
    wl_ref = next(it)
    b_ref = next(it)
    wds_ref = next(it) if has_ds else None
    bds_ref = next(it) if has_ds else None
    out_ref = next(it)
    xs_ref = next(it) if has_taps else None

    j = pl.program_id(1)
    x_f32 = x_ref[0]                                   # (C_in_p, TT) f32
    x_bf = x_f32.astype(jnp.bfloat16)                  # bf16 MXU operand

    # Stack the first K-1 dilated taps into the bf16 scratch; tap K-1 is x itself
    # (no copy).  Tap k at output column t reads input column t - (pad - k*dilation).
    if has_taps:
        for k in range(K - 1):
            left = pad - k * dilation                  # > 0 for k < K-1
            row = k * c_in_p                           # multiple of 16 -> packed-tile aligned
            pw = min(left, tt)
            if pw < tt:
                # TODO(synk): a pltpu.roll + fully aligned store would move this lane
                # shift onto the XLU; kept as a shifted store for safety.
                xs_ref[row:row + c_in_p, pw:] = x_bf[:, :tt - pw]
            if has_halo:
                hseg = h_ref[0, :, halo_w - left:halo_w - left + pw]
                prefix = jnp.where(j > 0, hseg, 0.0).astype(jnp.bfloat16)
            else:
                prefix = jnp.zeros((c_in_p, pw), jnp.bfloat16)
            xs_ref[row:row + c_in_p, :pw] = prefix

    # Causal dilated conv: bf16 MXU matmuls, f32 accumulation.
    acc = jnp.dot(wl_ref[...], x_bf, preferred_element_type=jnp.float32)
    if has_taps:
        acc = acc + jnp.dot(wt_ref[...], xs_ref[...],
                            preferred_element_type=jnp.float32)
    acc = acc + b_ref[...]                             # (C_out_p, 1) broadcast over lanes

    # Exact (erf-based) GELU, matching torch.nn.GELU() default.
    out = 0.5 * acc * (1.0 + jax.lax.erf(acc * _INV_SQRT2))
    # TODO(synk): nn.Dropout is identity here (eval semantics); training-mode dropout
    # is not implemented.

    if has_ds:
        res = jnp.dot(wds_ref[...], x_bf, preferred_element_type=jnp.float32)
        res = res + bds_ref[...]
    else:
        res = x_f32[:c_out_p, :]                       # identity residual, exact f32
    out_ref[0] = (out + res).astype(out_ref.dtype)


def prepare_tcn_params(params, *, kernel_size):
    """Weight prep hoisted out of the forward path (run once per parameter update)."""
    v = params["conv1_v"].astype(jnp.float32)          # (C_out, C_in, K)
    g = params["conv1_g"].astype(jnp.float32)          # (C_out, 1, 1)
    bias = params["conv1_b"].astype(jnp.float32)       # (C_out,)
    C_out, C_in, K = v.shape
    assert K == kernel_size

    # weight_norm (dim=0): w = g * v / ||v||, norm over (in_ch, k) per out channel.
    norm = jnp.sqrt(jnp.sum(v * v, axis=(1, 2), keepdims=True))
    w_eff = g * v / norm

    C_in_p = _round_up(C_in, 16)        # bf16 sublane packing (16-row tiles)
    C_out_p = _round_up(C_out, 8)       # f32 output rows

    w_pad = jnp.pad(w_eff, ((0, C_out_p - C_out), (0, C_in_p - C_in), (0, 0)))
    w_k = jnp.transpose(w_pad, (2, 0, 1))              # (K, C_out_p, C_in_p)
    w_taps = None
    if K > 1:
        w_taps = (jnp.transpose(w_k[:K - 1], (1, 0, 2))
                  .reshape(C_out_p, (K - 1) * C_in_p).astype(jnp.bfloat16))
    w_last = w_k[K - 1].astype(jnp.bfloat16)            # (C_out_p, C_in_p)
    b_f = jnp.pad(bias, (0, C_out_p - C_out)).reshape(C_out_p, 1)

    w_ds, b_ds = params.get("ds_w"), params.get("ds_b")
    if w_ds is not None:
        wds = jnp.pad(w_ds[:, :, 0].astype(jnp.float32),
                      ((0, C_out_p - C_out), (0, C_in_p - C_in))).astype(jnp.bfloat16)
        bds = jnp.pad(b_ds.astype(jnp.float32), (0, C_out_p - C_out)).reshape(C_out_p, 1)
    else:
        wds = bds = None
    return dict(w_taps=w_taps, w_last=w_last, b_f=b_f, wds=wds, bds=bds,
                k=K, c_in=C_in, c_out=C_out, c_in_p=C_in_p, c_out_p=C_out_p)


def _choose_time_tiling(B, T, pad, tile_t, bytes_per_col, vmem_budget):
    unit = 128
    halo_w = _round_up(pad, unit) if pad > 0 else 0
    # Cap the tile width by a VMEM budget (v7x has only 64 MiB / TensorCore).
    max_cols = max(unit, (vmem_budget // max(bytes_per_col, 1)) // unit * unit)
    tile_t = max(unit, min(_round_up(tile_t, unit), max_cols))

    single_tt = _round_up(T, unit)                     # lane-dense single tile
    # With B == 1, prefer >= 2 time tiles so both v7x TensorCores get work.
    want_multi = (B == 1 and T >= 2 * unit)
    if single_tt <= tile_t and not want_multi:
        return single_tt, 1

    step = max(unit, halo_w)                           # halo window must divide the tile
    max_tt = max(step, (tile_t // step) * step)
    min_nt = 2 if want_multi else 1

    chosen = None                                      # prefer a tile dividing T exactly
    tt = max_tt
    while tt >= step:
        if T % tt == 0 and T // tt >= min_nt:
            chosen = tt
            break
        tt -= step
    if chosen is None:
        chosen = max_tt
        if want_multi:
            chosen = min(chosen, max(step, _round_up(-(-T // 2), step)))
    nt = -(-T // chosen)
    return chosen, nt


def tcn_block_apply(x, prep, *, dilation, tile_t=2048):
    """x: (B, C_in, T) float32 (PyTorch NCW).  Returns (B, C_out, T) float32."""
    B, C_in, T = x.shape
    K = prep["k"]
    C_in_p, C_out_p, C_out = prep["c_in_p"], prep["c_out_p"], prep["c_out"]
    assert C_in == prep["c_in"]
    pad = (K - 1) * dilation
    has_ds = prep["wds"] is not None
    has_taps = K > 1
    if not has_ds:
        assert C_in == C_out, "identity residual requires in_ch == out_ch"

    bytes_per_col = (2 * C_in_p * 4 + 2 * C_out_p * 4
                     + ((K - 1) * C_in_p * 2 if has_taps else 0))
    TT, NT = _choose_time_tiling(B, T, pad, tile_t, bytes_per_col, 40 * 1024 * 1024)
    T_p = NT * TT
    has_halo = has_taps and pad > 0 and NT > 1
    halo_w = _round_up(pad, 128) if has_halo else 0

    xf = x.astype(jnp.float32)
    if C_in_p != C_in or T_p != T:
        x_p = jnp.pad(xf, ((0, 0), (0, C_in_p - C_in), (0, T_p - T)))
    else:
        x_p = xf                                       # no extra HBM pass

    in_arrays = [x_p]
    in_specs = [pl.BlockSpec((1, C_in_p, TT), lambda b, j: (b, 0, j))]
    if has_halo:
        r = TT // halo_w
        in_arrays.append(x_p)                          # second window into the same array
        in_specs.append(pl.BlockSpec(
            (1, C_in_p, halo_w),
            lambda b, j, _r=r: (b, 0, jnp.maximum(j * _r - 1, 0))))
    if has_taps:
        in_arrays.append(prep["w_taps"])
        in_specs.append(pl.BlockSpec((C_out_p, (K - 1) * C_in_p), lambda b, j: (0, 0)))
    in_arrays += [prep["w_last"], prep["b_f"]]
    in_specs += [pl.BlockSpec((C_out_p, C_in_p), lambda b, j: (0, 0)),
                 pl.BlockSpec((C_out_p, 1), lambda b, j: (0, 0))]
    if has_ds:
        in_arrays += [prep["wds"], prep["bds"]]
        in_specs += [pl.BlockSpec((C_out_p, C_in_p), lambda b, j: (0, 0)),
                     pl.BlockSpec((C_out_p, 1), lambda b, j: (0, 0))]

    scratch_shapes = []
    if has_taps:
        scratch_shapes.append(pltpu.VMEM(((K - 1) * C_in_p, TT), jnp.bfloat16))

    # VMEM limit derived from actual buffer sizes (+50% headroom), capped for v7x.
    est = (2 * C_in_p * TT * 4 + 2 * C_out_p * TT * 4
           + ((K - 1) * C_in_p * TT * 2 if has_taps else 0)
           + (2 * C_in_p * halo_w * 4 if has_halo else 0)
           + 4 * (K * C_in_p * C_out_p * 2 + C_out_p * 4)
           + (4 * (C_out_p * C_in_p * 2 + C_out_p * 4) if has_ds else 0))
    vmem_limit = int(min(64 * 1024 * 1024, max(16 * 1024 * 1024, est * 3 // 2 + (2 << 20))))

    kern = functools.partial(
        _tcn_kernel, K=K, dilation=dilation, pad=pad, tt=TT,
        c_in_p=C_in_p, c_out_p=C_out_p, halo_w=halo_w,
        has_ds=has_ds, has_halo=has_halo, has_taps=has_taps)

    out = pl.pallas_call(
        kern,
        out_shape=jax.ShapeDtypeStruct((B, C_out_p, T_p), jnp.float32),
        grid=(B, NT),
        in_specs=in_specs,
        out_specs=pl.BlockSpec((1, C_out_p, TT), lambda b, j: (b, 0, j)),
        scratch_shapes=scratch_shapes,
        compiler_params=pltpu.CompilerParams(
            dimension_semantics=("parallel", "parallel"),
            vmem_limit_bytes=vmem_limit),
    )(*in_arrays)

    return out[:, :C_out, :T]


def tcn_block_forward(x, params, *, kernel_size, dilation, tile_t=2048):
    prep = prepare_tcn_params(params, kernel_size=kernel_size)
    return tcn_block_apply(x, prep, dilation=dilation, tile_t=tile_t)


def tcn_block_reference(x, params, *, kernel_size, dilation, mxu_dtype=jnp.float32):
    """Pure-JAX reference mirroring the PyTorch forward (eval mode).

    With mxu_dtype=bfloat16 the matmul operands are cast exactly like the kernel
    (f32 accumulation), giving a tight parity target."""
    v, g, bias = params["conv1_v"], params["conv1_g"], params["conv1_b"]
    w_ds, b_ds = params["ds_w"], params["ds_b"]
    pad = (kernel_size - 1) * dilation
    norm = jnp.sqrt(jnp.sum(v * v, axis=(1, 2), keepdims=True))
    w_eff = (g * v / norm).astype(mxu_dtype)
    x_c = x.astype(mxu_dtype)
    x_pad = jnp.pad(x_c, ((0, 0), (0, 0), (pad, 0)))
    out = jax.lax.conv_general_dilated(
        x_pad, w_eff, window_strides=(1,), padding="VALID",
        rhs_dilation=(dilation,), dimension_numbers=("NCH", "OIH", "NCH"),
        preferred_element_type=jnp.float32)
    out = out + bias[None, :, None].astype(jnp.float32)
    out = 0.5 * out * (1.0 + jax.lax.erf(out * _INV_SQRT2))
    if w_ds is None:
        res = x.astype(jnp.float32)
    else:
        res = jax.lax.conv_general_dilated(
            x_c, w_ds.astype(mxu_dtype), window_strides=(1,), padding="VALID",
            dimension_numbers=("NCH", "OIH", "NCH"),
            preferred_element_type=jnp.float32) + b_ds[None, :, None]
    return out + res


def _check(name, *, B, C_in, C_out, T, K, DIL, with_ds, key, tile_t=2048):
    ks = jax.random.split(key, 6)
    x = jax.random.normal(ks[0], (B, C_in, T), jnp.float32)
    params = {
        "conv1_v": jax.random.normal(ks[1], (C_out, C_in, K), jnp.float32) * 0.3,
        "conv1_g": jax.random.normal(ks[2], (C_out, 1, 1), jnp.float32) * 0.2 + 1.0,
        "conv1_b": jax.random.normal(ks[3], (C_out,), jnp.float32) * 0.1,
        "ds_w": (jax.random.normal(ks[4], (C_out, C_in, 1), jnp.float32) * 0.3)
                if with_ds else None,
        "ds_b": (jax.random.normal(ks[5], (C_out,), jnp.float32) * 0.1)
                if with_ds else None,
    }
    out = tcn_block_forward(x, params, kernel_size=K, dilation=DIL, tile_t=tile_t)
    out = jax.block_until_ready(out)
    assert out.shape == (B, C_out, T), (name, out.shape)
    # Tight parity vs a bf16-operand / f32-accumulation reference (same rounding).
    ref_bf = tcn_block_reference(x, params, kernel_size=K, dilation=DIL,
                                 mxu_dtype=jnp.bfloat16)
    err_bf = float(jnp.max(jnp.abs(out - ref_bf)))
    assert jnp.allclose(out, ref_bf, atol=2e-3, rtol=2e-3), \
        f"{name}: max abs err vs bf16 reference {err_bf}"
    # Loose sanity vs the exact f32 torch-equivalent reference.
    ref_f32 = tcn_block_reference(x, params, kernel_size=K, dilation=DIL)
    err_f32 = float(jnp.max(jnp.abs(out - ref_f32)))
    assert jnp.allclose(out, ref_f32, atol=1e-1, rtol=1e-1), \
        f"{name}: max abs err vs f32 reference {err_f32}"


if __name__ == "__main__":
    key = jax.random.PRNGKey(0)
    k1, k2, k3, k4 = jax.random.split(key, 4)
    # 1) in_ch != out_ch (1x1 downsample residual), small single-tile sequence.
    _check("ds_single_tile", B=2, C_in=4, C_out=8, T=16, K=3, DIL=2,
           with_ds=True, key=k1)
    # 2) in_ch == out_ch (identity residual; 1x1 matmul skipped in-kernel).
    _check("identity_single_tile", B=2, C_in=8, C_out=8, T=16, K=3, DIL=2,
           with_ds=False, key=k2)
    # 3) tiled time dimension: halo window from the previous tile, B==1 -> 2 tiles.
    _check("tiled_halo_ds", B=1, C_in=8, C_out=16, T=256, K=3, DIL=4,
           with_ds=True, key=k3, tile_t=128)
    # 4) tiled, identity residual, no channel/time padding path (C_in=16, T=3*128).
    _check("tiled_halo_identity", B=1, C_in=16, C_out=16, T=384, K=3, DIL=8,
           with_ds=False, key=k4, tile_t=128)
    print("KERNEL_OK")
</pallas_src>

<mosaic_0001>
module attributes {stable_mosaic.version = 11 : i64} {
  func.func @_tcn_kernel(%arg0: i32, %arg1: i32, %arg2: memref<1x16x128xf32, #tpu.memory_space<vmem>>, %arg3: memref<8x32xbf16, #tpu.memory_space<vmem>>, %arg4: memref<8x16xbf16, #tpu.memory_space<vmem>>, %arg5: memref<8x1xf32, #tpu.memory_space<vmem>>, %arg6: memref<8x16xbf16, #tpu.memory_space<vmem>>, %arg7: memref<8x1xf32, #tpu.memory_space<vmem>>, %arg8: memref<1x8x128xf32, #tpu.memory_space<vmem>>, %arg9: memref<32x128xbf16, #tpu.memory_space<vmem>>) attributes {dimension_semantics = [#tpu.dimension_semantics<parallel>, #tpu.dimension_semantics<parallel>], iteration_bounds = array<i64: 2, 1>, scalar_prefetch = 0 : i64, scratch_operands = 1 : i64, tpu.core_type = #tpu.core_type<tc>, window_params = [{transform_indices = @transform_0, window_bounds = array<i64: 1, 16, 128>}, {pipeline_mode = #tpu.pipeline_mode<synchronous>, transform_indices = @transform_1, window_bounds = array<i64: 8, 32>}, {pipeline_mode = #tpu.pipeline_mode<synchronous>, transform_indices = @transform_2, window_bounds = array<i64: 8, 16>}, {pipeline_mode = #tpu.pipeline_mode<synchronous>, transform_indices = @transform_3, window_bounds = array<i64: 8, 1>}, {pipeline_mode = #tpu.pipeline_mode<synchronous>, transform_indices = @transform_4, window_bounds = array<i64: 8, 16>}, {pipeline_mode = #tpu.pipeline_mode<synchronous>, transform_indices = @transform_5, window_bounds = array<i64: 8, 1>}, {transform_indices = @transform_6, window_bounds = array<i64: 1, 8, 128>}]} {
    %c0 = arith.constant 0 : index
    %c0_0 = arith.constant 0 : index
    %c0_1 = arith.constant 0 : index
    %0 = vector.load %arg2[%c0, %c0_0, %c0_1] : memref<1x16x128xf32, #tpu.memory_space<vmem>>, vector<1x16x128xf32>
    %1 = vector.shape_cast %0 : vector<1x16x128xf32> to vector<16x128xf32>
    %2 = arith.truncf %1 : vector<16x128xf32> to vector<16x128xbf16>
    %3 = vector.extract_strided_slice %2 {offsets = [0, 0], sizes = [16, 124], strides = [1, 1]} : vector<16x128xbf16> to vector<16x124xbf16>
    %c0_2 = arith.constant 0 : index
    %c4 = arith.constant 4 : index
    %4 = vector.load %arg9[%c0_2, %c4] : memref<32x128xbf16, #tpu.memory_space<vmem>>, vector<16x124xbf16>
    tpu.vector_store %arg9[%c0_2, %c4], %3 {strides = array<i32>} : memref<32x128xbf16, #tpu.memory_space<vmem>>, vector<16x124xbf16>,
    %cst = arith.constant 0.000000e+00 : bf16
    %5 = vector.broadcast %cst : bf16 to vector<16x4xbf16>
    %c0_3 = arith.constant 0 : index
    %c0_4 = arith.constant 0 : index
    %6 = vector.load %arg9[%c0_3, %c0_4] : memref<32x128xbf16, #tpu.memory_space<vmem>>, vector<16x4xbf16>
    tpu.vector_store %arg9[%c0_3, %c0_4], %5 {strides = array<i32>} : memref<32x128xbf16, #tpu.memory_space<vmem>>, vector<16x4xbf16>,
    %7 = vector.extract_strided_slice %2 {offsets = [0, 0], sizes = [16, 126], strides = [1, 1]} : vector<16x128xbf16> to vector<16x126xbf16>
    %c16 = arith.constant 16 : index
    %c2 = arith.constant 2 : index
    %8 = vector.load %arg9[%c16, %c2] : memref<32x128xbf16, #tpu.memory_space<vmem>>, vector<16x126xbf16>
    tpu.vector_store %arg9[%c16, %c2], %7 {strides = array<i32>} : memref<32x128xbf16, #tpu.memory_space<vmem>>, vector<16x126xbf16>,
    %cst_5 = arith.constant 0.000000e+00 : bf16
    %9 = vector.broadcast %cst_5 : bf16 to vector<16x2xbf16>
    %c16_6 = arith.constant 16 : index
    %c0_7 = arith.constant 0 : index
    %10 = vector.load %arg9[%c16_6, %c0_7] : memref<32x128xbf16, #tpu.memory_space<vmem>>, vector<16x2xbf16>
    tpu.vector_store %arg9[%c16_6, %c0_7], %9 {strides = array<i32>} : memref<32x128xbf16, #tpu.memory_space<vmem>>, vector<16x2xbf16>,
    %c0_8 = arith.constant 0 : index
    %c0_9 = arith.constant 0 : index
    %11 = vector.load %arg4[%c0_8, %c0_9] : memref<8x16xbf16, #tpu.memory_space<vmem>>, vector<8x16xbf16>
    %cst_10 = arith.constant dense<0.000000e+00> : vector<8x128xf32>
    %12 = tpu.matmul %11, %2, %cst_10 {dimension_numbers = #tpu.dot_dimension_numbers<[1], [0], [0], [1], [0, 0, 1, 1], [], []>} : vector<8x16xbf16>, vector<16x128xbf16>, vector<8x128xf32> -> vector<8x128xf32>
    %c0_11 = arith.constant 0 : index
    %c0_12 = arith.constant 0 : index
    %13 = vector.load %arg3[%c0_11, %c0_12] : memref<8x32xbf16, #tpu.memory_space<vmem>>, vector<8x32xbf16>
    %c0_13 = arith.constant 0 : index
    %c0_14 = arith.constant 0 : index
    %14 = vector.load %arg9[%c0_13, %c0_14] : memref<32x128xbf16, #tpu.memory_space<vmem>>, vector<32x128xbf16>
    %cst_15 = arith.constant dense<0.000000e+00> : vector<8x128xf32>
    %15 = tpu.matmul %13, %14, %cst_15 {dimension_numbers = #tpu.dot_dimension_numbers<[1], [0], [0], [1], [0, 0, 1, 1], [], []>} : vector<8x32xbf16>, vector<32x128xbf16>, vector<8x128xf32> -> vector<8x128xf32>
    %16 = arith.addf %12, %15 : vector<8x128xf32>
    %c0_16 = arith.constant 0 : index
    %c0_17 = arith.constant 0 : index
    %17 = vector.load %arg5[%c0_16, %c0_17] : memref<8x1xf32, #tpu.memory_space<vmem>>, vector<8x1xf32>
    %18 = vector.broadcast %17 : vector<8x1xf32> to vector<8x128xf32>
    %19 = arith.addf %16, %18 : vector<8x128xf32>
    %cst_18 = arith.constant 5.000000e-01 : f32
    %20 = vector.broadcast %cst_18 : f32 to vector<8x128xf32>
    %21 = arith.mulf %20, %19 : vector<8x128xf32>
    %cst_19 = arith.constant 0.707106769 : f32
    %22 = vector.broadcast %cst_19 : f32 to vector<8x128xf32>
    %23 = arith.mulf %19, %22 : vector<8x128xf32>
    %24 = math.erf %23 : vector<8x128xf32>
    %cst_20 = arith.constant 1.000000e+00 : f32
    %25 = vector.broadcast %cst_20 : f32 to vector<8x128xf32>
    %26 = arith.addf %25, %24 : vector<8x128xf32>
    %27 = arith.mulf %21, %26 : vector<8x128xf32>
    %c0_21 = arith.constant 0 : index
    %c0_22 = arith.constant 0 : index
    %28 = vector.load %arg6[%c0_21, %c0_22] : memref<8x16xbf16, #tpu.memory_space<vmem>>, vector<8x16xbf16>
    %cst_23 = arith.constant dense<0.000000e+00> : vector<8x128xf32>
    %29 = tpu.matmul %28, %2, %cst_23 {dimension_numbers = #tpu.dot_dimension_numbers<[1], [0], [0], [1], [0, 0, 1, 1], [], []>} : vector<8x16xbf16>, vector<16x128xbf16>, vector<8x128xf32> -> vector<8x128xf32>
    %c0_24 = arith.constant 0 : index
    %c0_25 = arith.constant 0 : index
    %30 = vector.load %arg7[%c0_24, %c0_25] : memref<8x1xf32, #tpu.memory_space<vmem>>, vector<8x1xf32>
    %31 = vector.broadcast %30 : vector<8x1xf32> to vector<8x128xf32>
    %32 = arith.addf %29, %31 : vector<8x128xf32>
    %33 = arith.addf %27, %32 : vector<8x128xf32>
    %c0_26 = arith.constant 0 : index
    %c0_27 = arith.constant 0 : index
    %c0_28 = arith.constant 0 : index
    %34 = vector.load %arg8[%c0_26, %c0_27, %c0_28] : memref<1x8x128xf32, #tpu.memory_space<vmem>>, vector<1x8x128xf32>
    %35 = vector.shape_cast %34 : vector<1x8x128xf32> to vector<8x128xf32>
    %36 = vector.shape_cast %33 : vector<8x128xf32> to vector<1x8x128xf32>
    tpu.vector_store %arg8[%c0_26, %c0_27, %c0_28], %36 {strides = array<i32>} : memref<1x8x128xf32, #tpu.memory_space<vmem>>, vector<1x8x128xf32>,
    return
  }
  func.func @transform_0(%arg0: i32, %arg1: i32) -> (i32, i32, i32) {
    %c0_i32 = arith.constant 0 : i32
    %c0_i32_0 = arith.constant 0 : i32
    return %arg0, %c0_i32, %arg1 : i32, i32, i32
  }
  func.func @transform_1(%arg0: i32, %arg1: i32) -> (i32, i32) {
    %c0_i32 = arith.constant 0 : i32
    %c0_i32_0 = arith.constant 0 : i32
    %c0_i32_1 = arith.constant 0 : i32
    return %c0_i32, %c0_i32_0 : i32, i32
  }
  func.func @transform_2(%arg0: i32, %arg1: i32) -> (i32, i32) {
    %c0_i32 = arith.constant 0 : i32
    %c0_i32_0 = arith.constant 0 : i32
    %c0_i32_1 = arith.constant 0 : i32
    return %c0_i32, %c0_i32_0 : i32, i32
  }
  func.func @transform_3(%arg0: i32, %arg1: i32) -> (i32, i32) {
    %c0_i32 = arith.constant 0 : i32
    %c0_i32_0 = arith.constant 0 : i32
    %c0_i32_1 = arith.constant 0 : i32
    return %c0_i32, %c0_i32_0 : i32, i32
  }
  func.func @transform_4(%arg0: i32, %arg1: i32) -> (i32, i32) {
    %c0_i32 = arith.constant 0 : i32
    %c0_i32_0 = arith.constant 0 : i32
    %c0_i32_1 = arith.constant 0 : i32
    return %c0_i32, %c0_i32_0 : i32, i32
  }
  func.func @transform_5(%arg0: i32, %arg1: i32) -> (i32, i32) {
    %c0_i32 = arith.constant 0 : i32
    %c0_i32_0 = arith.constant 0 : i32
    %c0_i32_1 = arith.constant 0 : i32
    return %c0_i32, %c0_i32_0 : i32, i32
  }
  func.func @transform_6(%arg0: i32, %arg1: i32) -> (i32, i32, i32) {
    %c0_i32 = arith.constant 0 : i32
    %c0_i32_0 = arith.constant 0 : i32
    return %arg0, %c0_i32, %arg1 : i32, i32, i32
  }
}

</mosaic_0001>

<llo_original>
// kernel: tpu_custom_call.1
$region0: #{tpu_custom_call.1}
  #allocation0 [shape = 'u32[]', space=smem, size = 0x4, offset = 0x4, fixed_abs, tag = 'smem constant byte address 0x4 - core index']
  #allocation1 [shape = 'u32[72,128]{1,0:T(1,128)}', space=vmem, size = 0x9000, scoped, tag = 'internal scratch']
  #allocation2 [shape = 'bf16[32,128]{1,0:T(8,128)(2,1)}', space=vmem, size = 0x2000, scoped, tag = 'scratch operand']
  %s0 = inlined_call_operand.hbm [shape: f32[2,16,128], index: 0, kind: input, shape index: {}]
  %s1 = inlined_call_operand.vmem [shape: bf16[8,32], index: 1, kind: input, shape index: {}]
  %s2 = inlined_call_operand.vmem [shape: bf16[8,16], index: 2, kind: input, shape index: {}]
  %s3 = inlined_call_operand.vmem [shape: f32[8,1], index: 3, kind: input, shape index: {}]
  %s4 = inlined_call_operand.vmem [shape: bf16[8,16], index: 4, kind: input, shape index: {}]
  %s5 = inlined_call_operand.vmem [shape: f32[8,1], index: 5, kind: input, shape index: {}]
  %s6 = inlined_call_operand.hbm [shape: f32[2,8,128], index: 6, kind: output, shape index: {}]
  %s7 = sld [smem:[#allocation0]]
  $region61: #{tpu_custom_call.1} parent=0
    _
  %s9 = ssub.s32 1, %s7
  %s10 = scalar_select 0, %s9, %s7
  $region1: #{tpu_custom_call.1} parent=0
    #allocation3 [shape = 'u8[16384]{0}', space=vmem, size = 0x4000, scoped, tag = 'input window, operand 0']
    #allocation4 [shape = 's32[2]{0}', space=sflag, size = 0x8, scoped, tag = 'scoped memory for tpu_custom_call.1']
    #allocation5 [shape = 's32[2]{0}', space=sflag, size = 0x8, scoped, tag = 'scoped memory for tpu_custom_call.1']
    #allocation6 [shape = 'u8[8192]{0}', space=vmem, size = 0x2000, scoped, tag = 'output window, operand 0']
    %11 = vsyncpa [#allocation4], 0
    %s12 = scalar_lea.sflag [#allocation4], 1
    %13 = vsyncpa %s12, 0
    %14 = vsyncpa [#allocation5], 0
    %s15 = scalar_lea.sflag [#allocation5], 1
    %16 = vsyncpa %s15, 0
    loop: start=0, step=1, limit=4
    $region2: #{tpu_custom_call.1} parent=1 // loop_pre_header
      _
    $region3: #{tpu_custom_call.1} parent=1 // loop_header
      %s18 = sphi 0, %s22
      %p19 = scmp.ge.s32.totalorder %s18, 4
      %s25 = sphi 0, %s37
      %s26 = sphi 0, %s33
      %s27 = sphi 0, %s25
      %s28 = sphi 0, %s26
      %s29 = sphi 0, %s27
      %s30 = sphi 0, %s28
      %s42 = sphi 0, %s44
      %s45 = sphi 0, %s42
      %s46 = sphi 0, %s45
      %s62 = sphi 0, %s46
      %s66 = sphi 0, %s66
      %s68 = sphi 0, %s66
      %s69 = sphi 0, %s68
      %s83 = sphi 0, %s69
      %s87 = sphi 0, %s87
      %s89 = sphi 0, %s87
      %s90 = sphi 0, %s89
      %s104 = sphi 0, %s90
      %s108 = sphi 0, %s108
      %s110 = sphi 0, %s108
      %s111 = sphi 0, %s110
      %s125 = sphi 0, %s111
      %s129 = sphi 0, %s129
      %s131 = sphi 0, %s129
      %s132 = sphi 0, %s131
      %s146 = sphi 0, %s132
      %s150 = sphi 0, %s150
      %s152 = sphi 0, %s150
      %s153 = sphi 0, %s152
      %s167 = sphi 0, %s153
      %s175 = sphi 0, %s177
      %s178 = sphi 0, %s175
      %s179 = sphi 0, %s178
      %s195 = sphi 0, %s179
    $region4: #{tpu_custom_call.1} parent=1 // loop_header_branch
      %21 = sbr.rel (%p19) target = $region8
    $region5: #{tpu_custom_call.1} parent=1 // loop_body
      %s23 = ssub.s32 %s18, 1
      %s24 = ssub.s32 %s18, 2
      %s31 = sadd.s32 1, %s26
      %p32 = scmp.ge.s32.totalorder %s31, 1
      %s33 = scalar_select %p32, 0, %s31
      %s34 = sadd.s32 1, %s25
      %s35 = scalar_select %p32, %s34, %s25
      %p36 = scmp.ge.s32.totalorder %s35, 2
      %s37 = scalar_select %p36, 0, %s35
      %s38 = ssub.s32 %s25, %s37
      %s39 = ssub.s32 %s26, %s33
      %s40 = sor.u32 %s38, %s39
      %p41 = scmp.eq.s32.totalorder %s40, 0
      %s43 = sadd.s32 %s42, 1
      %s44 = scalar_select %p41, %s42, %s43
      %p47 = pneg %p41
      %p48 = scmp.eq.s32.totalorder %s18, 1
      %p49 = por %p47, %p48
      %p50 = scmp.ne.s32.totalorder %s42, %s45
      %p51 = scmp.eq.s32.totalorder %s18, 0
      %p52 = por %p50, %p51
      %p53 = scmp.ne.s32.totalorder %s42, %s45
      %p54 = scmp.eq.s32.totalorder %s23, 1
      %p55 = por %p53, %p54
      %p56 = scmp.ne.s32.totalorder %s45, %s46
      %p57 = scmp.eq.s32.totalorder %s23, 0
      %p58 = por %p56, %p57
      %p59 = scmp.ne.s32.totalorder %s45, %s46
      %p60 = scmp.eq.s32.totalorder %s24, 1
      %p61 = por %p59, %p60
      %p63 = scmp.ne.s32.totalorder %s46, %s62
      %p64 = scmp.eq.s32.totalorder %s24, 0
      %p65 = por %p63, %p64
      %s67 = sadd.s32 %s66, 1
      %p70 = scmp.eq.s32.totalorder %s18, 1
      %p71 = scmp.ne.s32.totalorder %s66, %s68
      %p72 = scmp.eq.s32.totalorder %s18, 0
      %p73 = por %p71, %p72
      %p74 = scmp.ne.s32.totalorder %s66, %s68
      %p75 = scmp.eq.s32.totalorder %s23, 1
      %p76 = por %p74, %p75
      %p77 = scmp.ne.s32.totalorder %s68, %s69
      %p78 = scmp.eq.s32.totalorder %s23, 0
      %p79 = por %p77, %p78
      %p80 = scmp.ne.s32.totalorder %s68, %s69
      %p81 = scmp.eq.s32.totalorder %s24, 1
      %p82 = por %p80, %p81
      %p84 = scmp.ne.s32.totalorder %s69, %s83
      %p85 = scmp.eq.s32.totalorder %s24, 0
      %p86 = por %p84, %p85
      %s88 = sadd.s32 %s87, 1
      %p91 = scmp.eq.s32.totalorder %s18, 1
      %p92 = scmp.ne.s32.totalorder %s87, %s89
      %p93 = scmp.eq.s32.totalorder %s18, 0
      %p94 = por %p92, %p93
      %p95 = scmp.ne.s32.totalorder %s87, %s89
      %p96 = scmp.eq.s32.totalorder %s23, 1
      %p97 = por %p95, %p96
      %p98 = scmp.ne.s32.totalorder %s89, %s90
      %p99 = scmp.eq.s32.totalorder %s23, 0
      %p100 = por %p98, %p99
      %p101 = scmp.ne.s32.totalorder %s89, %s90
      %p102 = scmp.eq.s32.totalorder %s24, 1
      %p103 = por %p101, %p102
      %p105 = scmp.ne.s32.totalorder %s90, %s104
      %p106 = scmp.eq.s32.totalorder %s24, 0
      %p107 = por %p105, %p106
      %s109 = sadd.s32 %s108, 1
      %p112 = scmp.eq.s32.totalorder %s18, 1
      %p113 = scmp.ne.s32.totalorder %s108, %s110
      %p114 = scmp.eq.s32.totalorder %s18, 0
      %p115 = por %p113, %p114
      %p116 = scmp.ne.s32.totalorder %s108, %s110
      %p117 = scmp.eq.s32.totalorder %s23, 1
      %p118 = por %p116, %p117
      %p119 = scmp.ne.s32.totalorder %s110, %s111
      %p120 = scmp.eq.s32.totalorder %s23, 0
      %p121 = por %p119, %p120
      %p122 = scmp.ne.s32.totalorder %s110, %s111
      %p123 = scmp.eq.s32.totalorder %s24, 1
      %p124 = por %p122, %p123
      %p126 = scmp.ne.s32.totalorder %s111, %s125
      %p127 = scmp.eq.s32.totalorder %s24, 0
      %p128 = por %p126, %p127
      %s130 = sadd.s32 %s129, 1
      %p133 = scmp.eq.s32.totalorder %s18, 1
      %p134 = scmp.ne.s32.totalorder %s129, %s131
      %p135 = scmp.eq.s32.totalorder %s18, 0
      %p136 = por %p134, %p135
      %p137 = scmp.ne.s32.totalorder %s129, %s131
      %p138 = scmp.eq.s32.totalorder %s23, 1
      %p139 = por %p137, %p138
      %p140 = scmp.ne.s32.totalorder %s131, %s132
      %p141 = scmp.eq.s32.totalorder %s23, 0
      %p142 = por %p140, %p141
      %p143 = scmp.ne.s32.totalorder %s131, %s132
      %p144 = scmp.eq.s32.totalorder %s24, 1
      %p145 = por %p143, %p144
      %p147 = scmp.ne.s32.totalorder %s132, %s146
      %p148 = scmp.eq.s32.totalorder %s24, 0
      %p149 = por %p147, %p148
      %s151 = sadd.s32 %s150, 1
      %p154 = scmp.eq.s32.totalorder %s18, 1
      %p155 = scmp.ne.s32.totalorder %s150, %s152
      %p156 = scmp.eq.s32.totalorder %s18, 0
      %p157 = por %p155, %p156
      %p158 = scmp.ne.s32.totalorder %s150, %s152
      %p159 = scmp.eq.s32.totalorder %s23, 1
      %p160 = por %p158, %p159
      %p161 = scmp.ne.s32.totalorder %s152, %s153
      %p162 = scmp.eq.s32.totalorder %s23, 0
      %p163 = por %p161, %p162
      %p164 = scmp.ne.s32.totalorder %s152, %s153
      %p165 = scmp.eq.s32.totalorder %s24, 1
      %p166 = por %p164, %p165
      %p168 = scmp.ne.s32.totalorder %s153, %s167
      %p169 = scmp.eq.s32.totalorder %s24, 0
      %p170 = por %p168, %p169
      %s171 = ssub.s32 %s25, %s37
      %s172 = ssub.s32 %s26, %s33
      %s173 = sor.u32 %s171, %s172
      %p174 = scmp.eq.s32.totalorder %s173, 0
      %s176 = sadd.s32 %s175, 1
      %s177 = scalar_select %p174, %s175, %s176
      %p180 = pneg %p174
      %p181 = scmp.eq.s32.totalorder %s18, 1
      %p182 = por %p180, %p181
      %p183 = scmp.ne.s32.totalorder %s175, %s178
      %p184 = scmp.eq.s32.totalorder %s18, 0
      %p185 = por %p183, %p184
      %p186 = scmp.ne.s32.totalorder %s175, %s178
      %p187 = scmp.eq.s32.totalorder %s23, 1
      %p188 = por %p186, %p187
      %p189 = scmp.ne.s32.totalorder %s178, %s179
      %p190 = scmp.eq.s32.totalorder %s23, 0
      %p191 = por %p189, %p190
      %p192 = scmp.ne.s32.totalorder %s178, %s179
      %p193 = scmp.eq.s32.totalorder %s24, 1
      %p194 = por %p192, %p193
      %p196 = scmp.ne.s32.totalorder %s179, %s195
      %p197 = scmp.eq.s32.totalorder %s24, 0
      %p198 = por %p196, %p197
      %p199 = scmp.le.s32.totalorder 1, %s18
      %p200 = scmp.lt.s32.totalorder %s18, 3
      %p201 = pnand %p199, %p200
      %p202 = pneg %p201
      // Predicated region
      $region9: #{tpu_custom_call.1} parent=5 // pred_check
        _
      $region10: #{tpu_custom_call.1} parent=5 // pred_check_branch
        %204 = sbr.rel (%p201) target = $region12
      $region11: #{tpu_custom_call.1} parent=5 // pred_region
        %s205 = ssub.s32 %s18, 1
        // Predicated region
        $region13: #{tpu_custom_call.1} parent=11 // pred_check
          %p206 = pneg %p79
        $region14: #{tpu_custom_call.1} parent=11 // pred_check_branch
          %208 = sbr.rel (%p206) target = $region16
        $region15: #{tpu_custom_call.1} parent=11 // pred_region
          _
        $region16: #{tpu_custom_call.1} parent=11 // pred_fallthru
          _
        // Predicated region
        $region17: #{tpu_custom_call.1} parent=11 // pred_check
          %p209 = pneg %p100
        $region18: #{tpu_custom_call.1} parent=11 // pred_check_branch
          %211 = sbr.rel (%p209) target = $region20
        $region19: #{tpu_custom_call.1} parent=11 // pred_region
          _
        $region20: #{tpu_custom_call.1} parent=11 // pred_fallthru
          _
        // Predicated region
        $region21: #{tpu_custom_call.1} parent=11 // pred_check
          %p212 = pneg %p121
        $region22: #{tpu_custom_call.1} parent=11 // pred_check_branch
          %214 = sbr.rel (%p212) target = $region24
        $region23: #{tpu_custom_call.1} parent=11 // pred_region
          _
        $region24: #{tpu_custom_call.1} parent=11 // pred_fallthru
          _
        // Predicated region
        $region25: #{tpu_custom_call.1} parent=11 // pred_check
          %p215 = pneg %p142
        $region26: #{tpu_custom_call.1} parent=11 // pred_check_branch
          %217 = sbr.rel (%p215) target = $region28
        $region27: #{tpu_custom_call.1} parent=11 // pred_region
          _
        $region28: #{tpu_custom_call.1} parent=11 // pred_fallthru
          _
        // Predicated region
        $region29: #{tpu_custom_call.1} parent=11 // pred_check
          %p218 = pneg %p163
        $region30: #{tpu_custom_call.1} parent=11 // pred_check_branch
          %220 = sbr.rel (%p218) target = $region32
        $region31: #{tpu_custom_call.1} parent=11 // pred_region
          _
        $region32: #{tpu_custom_call.1} parent=11 // pred_fallthru
          _
      $region12: #{tpu_custom_call.1} parent=5 // pred_fallthru
        _
      %p221 = scmp.lt.s32.totalorder %s18, 2
      // Predicated region
      $region33: #{tpu_custom_call.1} parent=5 // pred_check
        %p222 = pneg %p221
      $region34: #{tpu_custom_call.1} parent=5 // pred_check_branch
        %224 = sbr.rel (%p222) target = $region36
      $region35: #{tpu_custom_call.1} parent=5 // pred_region
        // Predicated region
        $region37: #{tpu_custom_call.1} parent=35 // pred_check
          %p225 = pneg %p52
        $region38: #{tpu_custom_call.1} parent=35 // pred_check_branch
          %227 = sbr.rel (%p225) target = $region40
        $region39: #{tpu_custom_call.1} parent=35 // pred_region
          %s228 = sand.u32 %s42, 1
          %s229 = scalar_lea.sflag [#allocation4], %s228
          %s230 = sand.u32 %s42, 1
          %s231 = smul.addr %s230, 16
          %s232 = scalar_lea.vmem [#allocation3], %s231
          %234 = vsyncadd %s229, 0
          %s235 = smul.addr %s25, 2
          %s236 = sadd.s32 %s26, %s235
          %s237 = smul.addr %s236, 8
          %s238 = scalar_lea.hbm %s0, %s237
          %s239 = sshll.u32 %s238, 4
          %s240 = int_to_ptr.hbm [resolvable:$true] %s239
          %s241 = sshll.u32 %s232, 4
          %s242 = int_to_ptr.vmem [resolvable:$true] %s241
          %247 = dma.hbm_to_vmem [thread:$0]  %s240, 256, %s242, %s229, 128, 128, 8
        $region40: #{tpu_custom_call.1} parent=35 // pred_fallthru
          _
      $region36: #{tpu_custom_call.1} parent=5 // pred_fallthru
        _
      %p248 = scmp.le.s32.totalorder 1, %s18
      %p249 = scmp.lt.s32.totalorder %s18, 3
      %p250 = pnand %p248, %p249
      %p251 = pneg %p250
      // Predicated region
      $region41: #{tpu_custom_call.1} parent=5 // pred_check
        _
      $region42: #{tpu_custom_call.1} parent=5 // pred_check_branch
        %253 = sbr.rel (%p250) target = $region44
      $region43: #{tpu_custom_call.1} parent=5 // pred_region
        %s254 = ssub.s32 %s18, 1
        %s255 = sand.u32 %s45, 1
        %s256 = scalar_lea.sflag [#allocation4], %s255
        %s257 = sand.u32 %s45, 1
        %s258 = smul.addr %s257, 16
        %s259 = scalar_lea.vmem [#allocation3], %s258
        // Predicated region
        $region45: #{tpu_custom_call.1} parent=43 // pred_check
          %p260 = pneg %p58
        $region46: #{tpu_custom_call.1} parent=43 // pred_check_branch
          %262 = sbr.rel (%p260) target = $region48
        $region47: #{tpu_custom_call.1} parent=43 // pred_region
          %264 = dma.done %s256, 256
        $region48: #{tpu_custom_call.1} parent=43 // pred_fallthru
          _
        %s265 = sand.u32 %s45, 1
        %s266 = scalar_lea.sflag [#allocation4], %s265
        %s267 = sand.u32 %s45, 1
        %s268 = smul.addr %s267, 16
        %s269 = scalar_lea.vmem [#allocation3], %s268
        %p270 = pneg %p58
        %p271 = pneg %p55
        %p272 = pneg %p79
        %p273 = pneg %p76
        %p274 = pneg %p100
        %p275 = pneg %p97
        %p276 = pneg %p121
        %p277 = pneg %p118
        %p278 = pneg %p142
        %p279 = pneg %p139
        %p280 = pneg %p163
        %p281 = pneg %p160
        %p282 = pneg %p191
        %p283 = pneg %p188
        %s284 = sand.u32 %s178, 1
        %s285 = scalar_lea.sflag [#allocation5], %s284
        %s286 = sand.u32 %s178, 1
        %s287 = smul.addr %s286, 8
        %s288 = scalar_lea.vmem [#allocation6], %s287
        %v290 = vld [vmem:[%s259] sm:$0xff]
        %v291 = vld [vmem:[%s259 + $0x8] sm:$0xff]
        %v292 = vpack.c.bf16 %v290, %v290
        %v293 = vpack.c.bf16 %v291, %v291
        %296 = vrot.lane.b32.xlu0 %v292, 4
        %v297 = vpop.permute.xlu0 %296
        %298 = vrot.lane.b32.xlu0 %v293, 4
        %v299 = vpop.permute.xlu0 %298
        %vm302 = vcmask 1043488
        %303 = vst.msk [vmem:[#allocation2] sm:$0xf] %vm302, %v297
        %304 = vst.msk [vmem:[#allocation2 + $0x4] sm:$0xf] %vm302, %v299
        %vm305 = vcmask 27648
        %306 = vst.msk [vmem:[#allocation2] sm:$0xf] %vm305, 0
        %307 = vst.msk [vmem:[#allocation2 + $0x4] sm:$0xf] %vm305, 0
        %308 = vrot.lane.b32.xlu0 %v292, 2
        %v309 = vpop.permute.xlu0 %308
        %310 = vrot.lane.b32.xlu0 %v293, 2
        %v311 = vpop.permute.xlu0 %310
        %vm314 = vcmask 1043472
        %315 = vst.msk [vmem:[#allocation2 + $0x8] sm:$0xf] %vm314, %v309
        %316 = vst.msk [vmem:[#allocation2 + $0xc] sm:$0xf] %vm314, %v311
        %vm317 = vcmask 11264
        %318 = vst.msk [vmem:[#allocation2 + $0x8] sm:$0xf] %vm317, 0
        %319 = vst.msk [vmem:[#allocation2 + $0xc] sm:$0xf] %vm317, 0
        %v320 = vld [vmem:[%s2] sm:$0xf]
        %v321 = vld [vmem:[%s1] sm:$0xf]
        %v322 = vld [vmem:[#allocation2] sm:$0xf]
        %v323 = vld [vmem:[#allocation2 + $0x4] sm:$0xf]
        %v324 = vld [vmem:[#allocation2 + $0x8] sm:$0xf]
        %v325 = vld [vmem:[#allocation2 + $0xc] sm:$0xf]
        %v330 = vunpack.c.l.b16 %v322
        %v331 = vunpack.c.l.b16 %v323
        %v332 = vunpack.c.l.b16 %v324
        %v333 = vunpack.c.l.b16 %v325
        %v334 = vpack.c.b16 %v331, %v330
        %v335 = vpack.c.b16 %v333, %v332
        %vm338 = vcmask 261120
        %v340 = vsel %vm338, %v321, 0
        %342 = vmatpush.bf16.msra.mxu0 0
        %343 = vmatpush.bf16.msra.mxu0 0
        %344 = vmatpush.bf16.msra.mxu0 0
        %345 = vmatpush.bf16.msra.mxu0 0
        %346 = vmatpush.bf16.msra.mxu0 0
        %347 = vmatpush.bf16.msra.mxu0 0
        %348 = vmatpush.bf16.msra.mxu0 %v335
        %349 = vmatpush.bf16.msra.mxu0 %v334
        %350 = vmatmul.bf16.gmra.mxu0 %v340
        %v351 = vpop.f32.mrf.mxu0
        %v352 = vadd.f32 0.0, %v351
        %v353 = vpop.f32.mrf.mxu0
        %354 = vdwg.mxu0
        %v355 = vunpack.c.l.b16 %v292
        %v356 = vunpack.c.l.b16 %v293
        %v357 = vpack.c.b16 %v356, %v355
        %vm359 = vcmask 130048
        %v361 = vsel %vm359, %v320, 0
        %363 = vmatpush.bf16.msra.mxu0 0
        %364 = vmatpush.bf16.msra.mxu0 0
        %365 = vmatpush.bf16.msra.mxu0 0
        %366 = vmatpush.bf16.msra.mxu0 0
        %367 = vmatpush.bf16.msra.mxu0 0
        %368 = vmatpush.bf16.msra.mxu0 0
        %369 = vmatpush.bf16.msra.mxu0 0
        %370 = vmatpush.bf16.msra.mxu0 %v357
        %371 = vmatmul.bf16.gmra.mxu0 %v361
        %v372 = vpop.f32.mrf.mxu0
        %v373 = vadd.f32 %v352, %v372
        %v374 = vpop.f32.mrf.mxu0
        %375 = vdwg.mxu0
        %v376 = vld [vmem:[%s3] sm:$0xff]
        %378 = vset.pattern.permute.xlu0 0
        %379 = vperm.xlu0 %378, %v376
        %v380 = vpop.permute.xlu0 %379
        %v382 = vadd.f32 %v373, %v380
        %v383 = vmul.f32 %v382, 0.5
        %v384 = vmul.f32 %v382, 0.70710677
        %v385 = vmul.f32 %v384, %v384
        %v386 = vmin.f32 16.0, %v385
        %v387 = vmul.f32 %v386, 2.1237322e-06
        %v388 = vadd.f32 %v387, 0.00028619796
        %v389 = vmul.f32 %v386, %v388
        %v390 = vadd.f32 %v389, 0.0036580483
        %v391 = vmul.f32 %v386, %v390
        %v392 = vadd.f32 %v391, 0.05243302
        %v393 = vmul.f32 %v386, %v392
        %v394 = vadd.f32 %v393, 0.18741608
        %v395 = vmul.f32 %v386, %v394
        %v396 = vadd.f32 %v395, 1.1283791
        %v397 = vmul.f32 %v384, %v396
        %v398 = vmul.f32 %v386, 3.8918573e-05
        %v399 = vadd.f32 %v398, 0.001143296
        %v400 = vmul.f32 %v386, %v399
        %v401 = vadd.f32 %v400, 0.014752088
        %v402 = vmul.f32 %v386, %v401
        %v403 = vadd.f32 %v402, 0.112945676
        %v404 = vmul.f32 %v386, %v403
        %v405 = vadd.f32 %v404, 0.4994258
        %v406 = vmul.f32 %v386, %v405
        %v407 = vadd.f32 %v406, 1.0
        %v408 = vrcp.pop %v407
        %v409 = vmul.f32 %v407, %v408
        %v410 = vsub.f32 1.0, %v409
        %v411 = vmul.f32 %v408, %v410
        %v412 = vadd.f32 %v408, %v411
        %vm413 = vweird.f32 %v407
        %vm414 = vweird.f32 %v408
        %vm415 = vmor %vm413, %vm414
        %v416 = vsel %vm415, %v408, %v412
        %v417 = vand.u32 2147483647, %v407
        %vm418 = vcmp.eq.f32.partialorder %v417, 8.507059e+37
        %v419 = vand.u32 %v407, 2147483648
        %v420 = vor.u32 1.1754944e-38, %v419
        %v421 = vsel %vm418, %v420, %v416
        %v422 = vmul.f32 %v397, %v421
        %v423 = vmin.f32 %v422, 1.0
        %v424 = vmax.f32 %v423, -1.0
        %v425 = vadd.f32 %v424, 1.0
        %v426 = vmul.f32 %v383, %v425
        %v427 = vld [vmem:[%s4] sm:$0xf]
        %v428 = vld [vmem:[%s5] sm:$0xff]
        %430 = vset.pattern.permute.xlu0 0
        %431 = vperm.xlu0 %430, %v428
        %v432 = vpop.permute.xlu0 %431
        %v435 = vsel %vm359, %v427, 0
        %437 = vmatpush.bf16.msra.mxu0 0
        %438 = vmatpush.bf16.msra.mxu0 0
        %439 = vmatpush.bf16.msra.mxu0 0
        %440 = vmatpush.bf16.msra.mxu0 0
        %441 = vmatpush.bf16.msra.mxu0 0
        %442 = vmatpush.bf16.msra.mxu0 0
        %443 = vmatpush.bf16.msra.mxu0 0
        %444 = vmatpush.bf16.msra.mxu0 %v357
        %445 = vmatmul.bf16.gmra.mxu0 %v435
        %v446 = vpop.f32.mrf.mxu0
        %v447 = vadd.f32 %v432, %v446
        %v448 = vpop.f32.mrf.mxu0
        %449 = vdwg.mxu0
        %v450 = vadd.f32 %v426, %v447
        %451 = vst [vmem:[%s288] sm:$0xff] %v450
        %s452 = sand.u32 %s178, 1
        %s453 = scalar_lea.sflag [#allocation5], %s452
        %s454 = sand.u32 %s178, 1
        %s455 = smul.addr %s454, 8
        %s456 = scalar_lea.vmem [#allocation6], %s455
        // Predicated region
        $region49: #{tpu_custom_call.1} parent=43 // pred_check
          %p457 = pneg %p188
        $region50: #{tpu_custom_call.1} parent=43 // pred_check_branch
          %459 = sbr.rel (%p457) target = $region52
        $region51: #{tpu_custom_call.1} parent=43 // pred_region
          %461 = vsyncadd %s453, 0
          %s462 = sadd.s32 %s28, %s27
          %s463 = smul.addr %s462, 8
          %s464 = scalar_lea.hbm %s6, %s463
          %s466 = sshll.u32 %s456, 4
          %s467 = int_to_ptr.vmem [resolvable:$true] %s466
          %s468 = sshll.u32 %s464, 4
          %s469 = int_to_ptr.hbm [resolvable:$true] %s468
          %471 = dma.vmem_to_hbm [thread:$0]  %s467, 128, %s469, %s453
        $region52: #{tpu_custom_call.1} parent=43 // pred_fallthru
          _
      $region44: #{tpu_custom_call.1} parent=5 // pred_fallthru
        _
      %p472 = scmp.le.s32.totalorder 2, %s18
      // Predicated region
      $region53: #{tpu_custom_call.1} parent=5 // pred_check
        %p473 = pneg %p472
      $region54: #{tpu_custom_call.1} parent=5 // pred_check_branch
        %475 = sbr.rel (%p473) target = $region56
      $region55: #{tpu_custom_call.1} parent=5 // pred_region
        %s476 = ssub.s32 %s18, 2
        // Predicated region
        $region57: #{tpu_custom_call.1} parent=55 // pred_check
          %p477 = pneg %p194
        $region58: #{tpu_custom_call.1} parent=55 // pred_check_branch
          %479 = sbr.rel (%p477) target = $region60
        $region59: #{tpu_custom_call.1} parent=55 // pred_region
          %s480 = sand.u32 %s179, 1
          %s481 = scalar_lea.sflag [#allocation5], %s480
          %s482 = sand.u32 %s179, 1
          %s483 = smul.addr %s482, 8
          %s484 = scalar_lea.vmem [#allocation6], %s483
          %486 = dma.done %s481, 128
        $region60: #{tpu_custom_call.1} parent=55 // pred_fallthru
          _
      $region56: #{tpu_custom_call.1} parent=5 // pred_fallthru
        _
    $region6: #{tpu_custom_call.1} parent=1 // loop_footer
      %s22 = sadd.s32 1, %s18
    $region7: #{tpu_custom_call.1} parent=1 // loop_footer_branch
      %17 = sbr.rel target = $region3
    $region8: #{tpu_custom_call.1} parent=1 // loop_exit
      _
    %487 = vsyncpa [#allocation4], 1
    %s488 = scalar_lea.sflag [#allocation4], 1
    %489 = vsyncpa %s488, 1
    %490 = vsyncpa [#allocation5], 1
    %s491 = scalar_lea.sflag [#allocation5], 1
    %492 = vsyncpa %s491, 1

</llo_original>
